<compile_context>
chip_gen: v6e
topology: v6e:2x2x1
jax: 0.10.0
libtpu: 0.0.40
codegen_flags: <defaults>
</compile_context>

<pallas_src>
import jax
import jax.numpy as jnp
from jax.experimental import pallas as pl
from jax.experimental.pallas import tpu as pltpu

K_PAD = 8      # fc1 input features (3) zero-padded to 8 so fc1 is a single MXU matmul
TILE_B = 4096  # batch rows per grid step (multiple of 128 -> lane-dense I/O); sweep 2048-8192


def mlp_kernel(xt_ref, w1t_ref, b1_ref, w2t_ref, b2_ref, w3t_ref, b3_ref, o_ref):
    xt = xt_ref[...]                                   # (8, TB): 3 real feature rows + 5 zero rows

    # fc1 on the MXU: (64, 8) @ (8, TB) -> (64, TB); zero K-padding is inert.
    h1 = jnp.tanh(
        jnp.dot(w1t_ref[...], xt, preferred_element_type=jnp.float32)
        + b1_ref[...]                                  # (64, 1) lane-broadcast
    )                                                  # (64, TB)

    # fc2 on the MXU: (128, 64) @ (64, TB) -> (128, TB).
    h2 = jnp.tanh(
        jnp.dot(w2t_ref[...], h1, preferred_element_type=jnp.float32)
        + b2_ref[...]                                  # (128, 1) lane-broadcast
    )                                                  # (128, TB)

    # fc3 on the MXU: (1, 128) @ (128, TB) -> (1, TB) (keeps the VALU/XLU path free).
    z = jnp.dot(w3t_ref[...], h2, preferred_element_type=jnp.float32) + b3_ref[...]

    # Lane-dense (1, TB) store: batch lives on the 128-wide lane axis.
    o_ref[...] = jax.nn.sigmoid(z)


def prepare_params(w1, b1, w2, b2, w3, b3):
    """Transpose to (out_features, in_features); zero-pad fc1's K from 3 to 8."""
    w1t = jnp.zeros((64, K_PAD), jnp.float32).at[:, :3].set(w1.T)   # (64, 8)
    b1t = b1.T.astype(jnp.float32)                                  # (64, 1)
    w2t = w2.T.astype(jnp.float32)                                  # (128, 64)
    b2t = b2.T.astype(jnp.float32)                                  # (128, 1)
    w3t = w3.T.astype(jnp.float32)                                  # (1, 128)
    b3t = b3.astype(jnp.float32)                                    # (1, 1)
    return w1t, b1t, w2t, b2t, w3t, b3t


def mlp_forward(x, params, *, tile_b=TILE_B):
    w1t, b1t, w2t, b2t, w3t, b3t = params
    B = x.shape[0]

    # Clamp the tile to the (128-aligned) batch; when possible keep >=2 grid steps
    # so the "parallel" batch axis actually spreads across both v7x TensorCores.
    b_align = pl.cdiv(B, 128) * 128
    tile_b = min(tile_b, b_align)
    if b_align // tile_b < 2 and b_align >= 256:
        tile_b = max(128, ((b_align // 2) // 128) * 128)
    B_pad = pl.cdiv(B, tile_b) * tile_b

    # Batch-on-lanes input slab (K_PAD, B_pad). Padded feature rows / batch cols are
    # zero and numerically inert (padded outputs are sliced off below).
    # TODO(synk): for very large B this transpose/pad is a separate XLA HBM pass;
    # if the producer can emit x as (3, B) directly, feed it straight to the kernel.
    xt = jnp.zeros((K_PAD, B_pad), jnp.float32).at[:3, :B].set(x.T)

    resident = lambda a: pl.BlockSpec(a.shape, lambda i: (0, 0))  # DMA'd once, VMEM-resident

    out = pl.pallas_call(
        mlp_kernel,
        out_shape=jax.ShapeDtypeStruct((1, B_pad), jnp.float32),
        grid=(B_pad // tile_b,),
        in_specs=[
            pl.BlockSpec((K_PAD, tile_b), lambda i: (0, i)),   # x tile: batch on lanes
            resident(w1t), resident(b1t),
            resident(w2t), resident(b2t),
            resident(w3t), resident(b3t),
        ],
        out_specs=pl.BlockSpec((1, tile_b), lambda i: (0, i)),
        compiler_params=pltpu.CompilerParams(
            dimension_semantics=("parallel",),       # shard batch tiles across TCs
            vmem_limit_bytes=32 * 1024 * 1024,       # headroom for TB up to ~8192 on v5e/v7x
        ),
    )(xt, w1t, b1t, w2t, b2t, w3t, b3t)

    return out[0, :B].reshape(B, 1)


def init_params(key):
    # Mimic PyTorch nn.Linear default init: U(-1/sqrt(fan_in), 1/sqrt(fan_in)).
    def linear(k, fan_in, fan_out):
        k1, k2 = jax.random.split(k)
        bound = 1.0 / jnp.sqrt(fan_in)
        w = jax.random.uniform(k1, (fan_in, fan_out), jnp.float32, -bound, bound)
        b = jax.random.uniform(k2, (1, fan_out), jnp.float32, -bound, bound)
        return w, b

    k1, k2, k3 = jax.random.split(key, 3)
    w1, b1 = linear(k1, 3, 64)
    w2, b2 = linear(k2, 64, 128)
    w3, b3 = linear(k3, 128, 1)
    return w1, b1, w2, b2, w3, b3


if __name__ == "__main__":
    key = jax.random.PRNGKey(0)
    k_params, k_x = jax.random.split(key)
    w1, b1, w2, b2, w3, b3 = init_params(k_params)
    params = prepare_params(w1, b1, w2, b2, w3, b3)

    B = 512  # small: tile adapts to 256 -> 2 grid steps, exercises the megacore path
    x = jax.random.normal(k_x, (B, 3), jnp.float32)

    fwd = jax.jit(lambda xx: mlp_forward(xx, params))
    out = jax.block_until_ready(fwd(x))

    # Pure-JAX reference (same math as the PyTorch forward), high-precision matmuls.
    hp = jax.lax.Precision.HIGHEST
    ref = jax.nn.sigmoid(
        jnp.dot(
            jnp.tanh(
                jnp.dot(jnp.tanh(jnp.dot(x, w1, precision=hp) + b1), w2, precision=hp)
                + b2
            ),
            w3,
            precision=hp,
        )
        + b3
    )

    assert out.shape == (B, 1)
    assert jnp.allclose(out, ref, atol=1e-4, rtol=1e-4), "mismatch vs reference"
    print("KERNEL_OK")
</pallas_src>

<mosaic_0001>
module attributes {stable_mosaic.version = 11 : i64} {
  func.func @mlp_kernel(%arg0: i32, %arg1: memref<8x256xf32, #tpu.memory_space<vmem>>, %arg2: memref<64x8xf32, #tpu.memory_space<vmem>>, %arg3: memref<64x1xf32, #tpu.memory_space<vmem>>, %arg4: memref<128x64xf32, #tpu.memory_space<vmem>>, %arg5: memref<128x1xf32, #tpu.memory_space<vmem>>, %arg6: memref<1x128xf32, #tpu.memory_space<vmem>>, %arg7: memref<1x1xf32, #tpu.memory_space<vmem>>, %arg8: memref<1x256xf32, #tpu.memory_space<vmem>>) attributes {dimension_semantics = [#tpu.dimension_semantics<parallel>], iteration_bounds = array<i64: 2>, scalar_prefetch = 0 : i64, scratch_operands = 0 : i64, tpu.core_type = #tpu.core_type<tc>, window_params = [{transform_indices = @transform_0, window_bounds = array<i64: 8, 256>}, {pipeline_mode = #tpu.pipeline_mode<synchronous>, transform_indices = @transform_1, window_bounds = array<i64: 64, 8>}, {pipeline_mode = #tpu.pipeline_mode<synchronous>, transform_indices = @transform_2, window_bounds = array<i64: 64, 1>}, {pipeline_mode = #tpu.pipeline_mode<synchronous>, transform_indices = @transform_3, window_bounds = array<i64: 128, 64>}, {pipeline_mode = #tpu.pipeline_mode<synchronous>, transform_indices = @transform_4, window_bounds = array<i64: 128, 1>}, {pipeline_mode = #tpu.pipeline_mode<synchronous>, transform_indices = @transform_5, window_bounds = array<i64: 1, 128>}, {pipeline_mode = #tpu.pipeline_mode<synchronous>, transform_indices = @transform_6, window_bounds = array<i64: 1, 1>}, {transform_indices = @transform_7, window_bounds = array<i64: 1, 256>}]} {
    %c0 = arith.constant 0 : index
    %c0_0 = arith.constant 0 : index
    %0 = vector.load %arg1[%c0, %c0_0] : memref<8x256xf32, #tpu.memory_space<vmem>>, vector<8x256xf32>
    %c0_1 = arith.constant 0 : index
    %c0_2 = arith.constant 0 : index
    %1 = vector.load %arg2[%c0_1, %c0_2] : memref<64x8xf32, #tpu.memory_space<vmem>>, vector<64x8xf32>
    %cst = arith.constant dense<0.000000e+00> : vector<64x256xf32>
    %2 = tpu.matmul %1, %0, %cst {dimension_numbers = #tpu.dot_dimension_numbers<[1], [0], [0], [1], [0, 0, 1, 1], [], []>} : vector<64x8xf32>, vector<8x256xf32>, vector<64x256xf32> -> vector<64x256xf32>
    %c0_3 = arith.constant 0 : index
    %c0_4 = arith.constant 0 : index
    %3 = vector.load %arg3[%c0_3, %c0_4] : memref<64x1xf32, #tpu.memory_space<vmem>>, vector<64x1xf32>
    %4 = vector.broadcast %3 : vector<64x1xf32> to vector<64x256xf32>
    %5 = arith.addf %2, %4 : vector<64x256xf32>
    %6 = math.tanh %5 : vector<64x256xf32>
    %c0_5 = arith.constant 0 : index
    %c0_6 = arith.constant 0 : index
    %7 = vector.load %arg4[%c0_5, %c0_6] : memref<128x64xf32, #tpu.memory_space<vmem>>, vector<128x64xf32>
    %cst_7 = arith.constant dense<0.000000e+00> : vector<128x256xf32>
    %8 = tpu.matmul %7, %6, %cst_7 {dimension_numbers = #tpu.dot_dimension_numbers<[1], [0], [0], [1], [0, 0, 1, 1], [], []>} : vector<128x64xf32>, vector<64x256xf32>, vector<128x256xf32> -> vector<128x256xf32>
    %c0_8 = arith.constant 0 : index
    %c0_9 = arith.constant 0 : index
    %9 = vector.load %arg5[%c0_8, %c0_9] : memref<128x1xf32, #tpu.memory_space<vmem>>, vector<128x1xf32>
    %10 = vector.broadcast %9 : vector<128x1xf32> to vector<128x256xf32>
    %11 = arith.addf %8, %10 : vector<128x256xf32>
    %12 = math.tanh %11 : vector<128x256xf32>
    %c0_10 = arith.constant 0 : index
    %c0_11 = arith.constant 0 : index
    %13 = vector.load %arg6[%c0_10, %c0_11] : memref<1x128xf32, #tpu.memory_space<vmem>>, vector<1x128xf32>
    %cst_12 = arith.constant dense<0.000000e+00> : vector<1x256xf32>
    %14 = tpu.matmul %13, %12, %cst_12 {dimension_numbers = #tpu.dot_dimension_numbers<[1], [0], [0], [1], [0, 0, 1, 1], [], []>} : vector<1x128xf32>, vector<128x256xf32>, vector<1x256xf32> -> vector<1x256xf32>
    %c0_13 = arith.constant 0 : index
    %c0_14 = arith.constant 0 : index
    %15 = vector.load %arg7[%c0_13, %c0_14] : memref<1x1xf32, #tpu.memory_space<vmem>>, vector<1x1xf32>
    %16 = vector.broadcast %15 : vector<1x1xf32> to vector<1x256xf32>
    %17 = arith.addf %14, %16 : vector<1x256xf32>
    %18 = arith.negf %17 : vector<1x256xf32>
    %19 = math.exp %18 : vector<1x256xf32>
    %cst_15 = arith.constant 1.000000e+00 : f32
    %20 = vector.broadcast %cst_15 : f32 to vector<1x256xf32>
    %21 = arith.addf %20, %19 : vector<1x256xf32>
    %22 = arith.divf %20, %21 : vector<1x256xf32>
    %c0_16 = arith.constant 0 : index
    %c0_17 = arith.constant 0 : index
    %23 = vector.load %arg8[%c0_16, %c0_17] : memref<1x256xf32, #tpu.memory_space<vmem>>, vector<1x256xf32>
    tpu.vector_store %arg8[%c0_16, %c0_17], %22 {strides = array<i32>} : memref<1x256xf32, #tpu.memory_space<vmem>>, vector<1x256xf32>,
    return
  }
  func.func @transform_0(%arg0: i32) -> (i32, i32) {
    %c0_i32 = arith.constant 0 : i32
    %c0_i32_0 = arith.constant 0 : i32
    return %c0_i32, %arg0 : i32, i32
  }
  func.func @transform_1(%arg0: i32) -> (i32, i32) {
    %c0_i32 = arith.constant 0 : i32
    %c0_i32_0 = arith.constant 0 : i32
    %c0_i32_1 = arith.constant 0 : i32
    return %c0_i32, %c0_i32_0 : i32, i32
  }
  func.func @transform_2(%arg0: i32) -> (i32, i32) {
    %c0_i32 = arith.constant 0 : i32
    %c0_i32_0 = arith.constant 0 : i32
    %c0_i32_1 = arith.constant 0 : i32
    return %c0_i32, %c0_i32_0 : i32, i32
  }
  func.func @transform_3(%arg0: i32) -> (i32, i32) {
    %c0_i32 = arith.constant 0 : i32
    %c0_i32_0 = arith.constant 0 : i32
    %c0_i32_1 = arith.constant 0 : i32
    return %c0_i32, %c0_i32_0 : i32, i32
  }
  func.func @transform_4(%arg0: i32) -> (i32, i32) {
    %c0_i32 = arith.constant 0 : i32
    %c0_i32_0 = arith.constant 0 : i32
    %c0_i32_1 = arith.constant 0 : i32
    return %c0_i32, %c0_i32_0 : i32, i32
  }
  func.func @transform_5(%arg0: i32) -> (i32, i32) {
    %c0_i32 = arith.constant 0 : i32
    %c0_i32_0 = arith.constant 0 : i32
    %c0_i32_1 = arith.constant 0 : i32
    return %c0_i32, %c0_i32_0 : i32, i32
  }
  func.func @transform_6(%arg0: i32) -> (i32, i32) {
    %c0_i32 = arith.constant 0 : i32
    %c0_i32_0 = arith.constant 0 : i32
    %c0_i32_1 = arith.constant 0 : i32
    return %c0_i32, %c0_i32_0 : i32, i32
  }
  func.func @transform_7(%arg0: i32) -> (i32, i32) {
    %c0_i32 = arith.constant 0 : i32
    %c0_i32_0 = arith.constant 0 : i32
    return %c0_i32, %arg0 : i32, i32
  }
}

</mosaic_0001>

<llo_original>
// kernel: _lambda_.1
$region0: #{_lambda_.1}
  #allocation0 [shape = 'u32[]', space=smem, size = 0x4, offset = 0x4, fixed_abs, tag = 'smem constant byte address 0x4 - core index']
  #allocation1 [shape = 'u32[144,128]{1,0:T(1,128)}', space=vmem, size = 0x12000, scoped, tag = 'internal scratch']
  #allocation2 [shape = 'f32[1,1]{1,0:T(1,128)S(1)}', space=vmem, size = 0x200, scoped, tag = 'scoped memory for _lambda_.1']
  %s0 = inlined_call_operand.vmem [shape: f32[8,512], index: 0, kind: input, shape index: {}]
  %s1 = inlined_call_operand.hbm [shape: f32[64,8], index: 1, kind: input, shape index: {}]
  %s2 = inlined_call_operand.hbm [shape: f32[64,1], index: 2, kind: input, shape index: {}]
  %s3 = inlined_call_operand.hbm [shape: f32[128,64], index: 3, kind: input, shape index: {}]
  %s4 = inlined_call_operand.hbm [shape: f32[128,1], index: 4, kind: input, shape index: {}]
  %s5 = inlined_call_operand.vmem [shape: f32[1,128], index: 5, kind: input, shape index: {}]
  %s6 = inlined_call_operand.<no memory space> [shape: f32[1,1], index: 6, kind: input, shape index: {}]
  %s7 = inlined_call_operand.hbm [shape: f32[1,512], index: 7, kind: output, shape index: {}]
  %s8 = sld [smem:[#allocation0]]
  $region77: #{_lambda_.1} parent=0
    _
  %s10 = ssub.s32 1, %s8
  %s11 = scalar_select 0, %s10, %s8
  %v12 = vstv %s6
  %13 = vst [vmem:[#allocation2] sm:$0x1] %v12
  $region1: #{_lambda_.1} parent=0
    #allocation3 [shape = 'u8[32768]{0}', space=vmem, size = 0x8000, scoped, tag = 'input window, operand 1, single buffered']
    #allocation4 [shape = 's32[2]{0}', space=sflag, size = 0x8, scoped, tag = 'scoped memory for _lambda_.1']
    #allocation5 [shape = 's32[2]{0}', space=sflag, size = 0x8, scoped, tag = 'scoped memory for _lambda_.1']
    #allocation6 [shape = 'u8[32768]{0}', space=vmem, size = 0x8000, scoped, tag = 'input window, operand 2, single buffered']
    #allocation7 [shape = 's32[1]{0}', space=sflag, size = 0x4, scoped, tag = 'scoped memory for _lambda_.1']
    #allocation8 [shape = 'u8[65536]{0}', space=vmem, size = 0x10000, scoped, tag = 'input window, operand 3, single buffered']
    #allocation9 [shape = 'u8[65536]{0}', space=vmem, size = 0x10000, scoped, tag = 'input window, operand 4, single buffered']
    #allocation10 [shape = 's32[1]{0}', space=sflag, size = 0x4, scoped, tag = 'scoped memory for _lambda_.1']
    #allocation11 [shape = 'u8[2048]{0}', space=vmem, size = 0x800, scoped, tag = 'output window, operand 0']
    %14 = vsyncpa [#allocation4], 0
    %15 = vsyncpa [#allocation7], 0
    %16 = vsyncpa [#allocation10], 0
    %17 = vsyncpa [#allocation5], 0
    %s18 = scalar_lea.sflag [#allocation5], 1
    %19 = vsyncpa %s18, 0
    loop: start=0, step=1, limit=4
    $region2: #{_lambda_.1} parent=1 // loop_pre_header
      _
    $region3: #{_lambda_.1} parent=1 // loop_header
      %s21 = sphi 0, %s25
      %p22 = scmp.ge.s32.totalorder %s21, 4
      %s31 = sphi 0, %s33
      %s34 = sphi 0, %s31
      %s35 = sphi 0, %s34
      %s51 = sphi 0, %s35
      %s55 = sphi 0, %s55
      %s57 = sphi 0, %s55
      %s58 = sphi 0, %s57
      %s72 = sphi 0, %s58
      %s76 = sphi 0, %s76
      %s78 = sphi 0, %s76
      %s79 = sphi 0, %s78
      %s93 = sphi 0, %s79
      %s97 = sphi 0, %s97
      %s99 = sphi 0, %s97
      %s100 = sphi 0, %s99
      %s114 = sphi 0, %s100
      %s118 = sphi 0, %s118
      %s120 = sphi 0, %s118
      %s121 = sphi 0, %s120
      %s135 = sphi 0, %s121
      %s139 = sphi 0, %s139
      %s141 = sphi 0, %s139
      %s142 = sphi 0, %s141
      %s156 = sphi 0, %s142
      %s160 = sphi 0, %s160
      %s162 = sphi 0, %s160
      %s163 = sphi 0, %s162
      %s177 = sphi 0, %s163
      %s183 = sphi 0, %s185
      %s186 = sphi 0, %s183
      %s187 = sphi 0, %s186
      %s203 = sphi 0, %s187
    $region4: #{_lambda_.1} parent=1 // loop_header_branch
      %24 = sbr.rel (%p22) target = $region8
    $region5: #{_lambda_.1} parent=1 // loop_body
      %s26 = ssub.s32 %s21, 1
      %s27 = ssub.s32 %s21, 2
      %s28 = sadd.s32 %s21, 1
      %s29 = ssub.s32 %s21, %s28
      %p30 = scmp.eq.s32.totalorder %s29, 0
      %s32 = sadd.s32 %s31, 1
      %s33 = scalar_select %p30, %s31, %s32
      %p36 = pneg %p30
      %p37 = scmp.eq.s32.totalorder %s21, 1
      %p38 = por %p36, %p37
      %p39 = scmp.ne.s32.totalorder %s31, %s34
      %p40 = scmp.eq.s32.totalorder %s21, 0
      %p41 = por %p39, %p40
      %p42 = scmp.ne.s32.totalorder %s31, %s34
      %p43 = scmp.eq.s32.totalorder %s26, 1
      %p44 = por %p42, %p43
      %p45 = scmp.ne.s32.totalorder %s34, %s35
      %p46 = scmp.eq.s32.totalorder %s26, 0
      %p47 = por %p45, %p46
      %p48 = scmp.ne.s32.totalorder %s34, %s35
      %p49 = scmp.eq.s32.totalorder %s27, 1
      %p50 = por %p48, %p49
      %p52 = scmp.ne.s32.totalorder %s35, %s51
      %p53 = scmp.eq.s32.totalorder %s27, 0
      %p54 = por %p52, %p53
      %s56 = sadd.s32 %s55, 1
      %p59 = scmp.eq.s32.totalorder %s21, 1
      %p60 = scmp.ne.s32.totalorder %s55, %s57
      %p61 = scmp.eq.s32.totalorder %s21, 0
      %p62 = por %p60, %p61
      %p63 = scmp.ne.s32.totalorder %s55, %s57
      %p64 = scmp.eq.s32.totalorder %s26, 1
      %p65 = por %p63, %p64
      %p66 = scmp.ne.s32.totalorder %s57, %s58
      %p67 = scmp.eq.s32.totalorder %s26, 0
      %p68 = por %p66, %p67
      %p69 = scmp.ne.s32.totalorder %s57, %s58
      %p70 = scmp.eq.s32.totalorder %s27, 1
      %p71 = por %p69, %p70
      %p73 = scmp.ne.s32.totalorder %s58, %s72
      %p74 = scmp.eq.s32.totalorder %s27, 0
      %p75 = por %p73, %p74
      %s77 = sadd.s32 %s76, 1
      %p80 = scmp.eq.s32.totalorder %s21, 1
      %p81 = scmp.ne.s32.totalorder %s76, %s78
      %p82 = scmp.eq.s32.totalorder %s21, 0
      %p83 = por %p81, %p82
      %p84 = scmp.ne.s32.totalorder %s76, %s78
      %p85 = scmp.eq.s32.totalorder %s26, 1
      %p86 = por %p84, %p85
      %p87 = scmp.ne.s32.totalorder %s78, %s79
      %p88 = scmp.eq.s32.totalorder %s26, 0
      %p89 = por %p87, %p88
      %p90 = scmp.ne.s32.totalorder %s78, %s79
      %p91 = scmp.eq.s32.totalorder %s27, 1
      %p92 = por %p90, %p91
      %p94 = scmp.ne.s32.totalorder %s79, %s93
      %p95 = scmp.eq.s32.totalorder %s27, 0
      %p96 = por %p94, %p95
      %s98 = sadd.s32 %s97, 1
      %p101 = scmp.eq.s32.totalorder %s21, 1
      %p102 = scmp.ne.s32.totalorder %s97, %s99
      %p103 = scmp.eq.s32.totalorder %s21, 0
      %p104 = por %p102, %p103
      %p105 = scmp.ne.s32.totalorder %s97, %s99
      %p106 = scmp.eq.s32.totalorder %s26, 1
      %p107 = por %p105, %p106
      %p108 = scmp.ne.s32.totalorder %s99, %s100
      %p109 = scmp.eq.s32.totalorder %s26, 0
      %p110 = por %p108, %p109
      %p111 = scmp.ne.s32.totalorder %s99, %s100
      %p112 = scmp.eq.s32.totalorder %s27, 1
      %p113 = por %p111, %p112
      %p115 = scmp.ne.s32.totalorder %s100, %s114
      %p116 = scmp.eq.s32.totalorder %s27, 0
      %p117 = por %p115, %p116
      %s119 = sadd.s32 %s118, 1
      %p122 = scmp.eq.s32.totalorder %s21, 1
      %p123 = scmp.ne.s32.totalorder %s118, %s120
      %p124 = scmp.eq.s32.totalorder %s21, 0
      %p125 = por %p123, %p124
      %p126 = scmp.ne.s32.totalorder %s118, %s120
      %p127 = scmp.eq.s32.totalorder %s26, 1
      %p128 = por %p126, %p127
      %p129 = scmp.ne.s32.totalorder %s120, %s121
      %p130 = scmp.eq.s32.totalorder %s26, 0
      %p131 = por %p129, %p130
      %p132 = scmp.ne.s32.totalorder %s120, %s121
      %p133 = scmp.eq.s32.totalorder %s27, 1
      %p134 = por %p132, %p133
      %p136 = scmp.ne.s32.totalorder %s121, %s135
      %p137 = scmp.eq.s32.totalorder %s27, 0
      %p138 = por %p136, %p137
      %s140 = sadd.s32 %s139, 1
      %p143 = scmp.eq.s32.totalorder %s21, 1
      %p144 = scmp.ne.s32.totalorder %s139, %s141
      %p145 = scmp.eq.s32.totalorder %s21, 0
      %p146 = por %p144, %p145
      %p147 = scmp.ne.s32.totalorder %s139, %s141
      %p148 = scmp.eq.s32.totalorder %s26, 1
      %p149 = por %p147, %p148
      %p150 = scmp.ne.s32.totalorder %s141, %s142
      %p151 = scmp.eq.s32.totalorder %s26, 0
      %p152 = por %p150, %p151
      %p153 = scmp.ne.s32.totalorder %s141, %s142
      %p154 = scmp.eq.s32.totalorder %s27, 1
      %p155 = por %p153, %p154
      %p157 = scmp.ne.s32.totalorder %s142, %s156
      %p158 = scmp.eq.s32.totalorder %s27, 0
      %p159 = por %p157, %p158
      %s161 = sadd.s32 %s160, 1
      %p164 = scmp.eq.s32.totalorder %s21, 1
      %p165 = scmp.ne.s32.totalorder %s160, %s162
      %p166 = scmp.eq.s32.totalorder %s21, 0
      %p167 = por %p165, %p166
      %p168 = scmp.ne.s32.totalorder %s160, %s162
      %p169 = scmp.eq.s32.totalorder %s26, 1
      %p170 = por %p168, %p169
      %p171 = scmp.ne.s32.totalorder %s162, %s163
      %p172 = scmp.eq.s32.totalorder %s26, 0
      %p173 = por %p171, %p172
      %p174 = scmp.ne.s32.totalorder %s162, %s163
      %p175 = scmp.eq.s32.totalorder %s27, 1
      %p176 = por %p174, %p175
      %p178 = scmp.ne.s32.totalorder %s163, %s177
      %p179 = scmp.eq.s32.totalorder %s27, 0
      %p180 = por %p178, %p179
      %s181 = ssub.s32 %s21, %s28
      %p182 = scmp.eq.s32.totalorder %s181, 0
      %s184 = sadd.s32 %s183, 1
      %s185 = scalar_select %p182, %s183, %s184
      %p188 = pneg %p182
      %p189 = scmp.eq.s32.totalorder %s21, 1
      %p190 = por %p188, %p189
      %p191 = scmp.ne.s32.totalorder %s183, %s186
      %p192 = scmp.eq.s32.totalorder %s21, 0
      %p193 = por %p191, %p192
      %p194 = scmp.ne.s32.totalorder %s183, %s186
      %p195 = scmp.eq.s32.totalorder %s26, 1
      %p196 = por %p194, %p195
      %p197 = scmp.ne.s32.totalorder %s186, %s187
      %p198 = scmp.eq.s32.totalorder %s26, 0
      %p199 = por %p197, %p198
      %p200 = scmp.ne.s32.totalorder %s186, %s187
      %p201 = scmp.eq.s32.totalorder %s27, 1
      %p202 = por %p200, %p201
      %p204 = scmp.ne.s32.totalorder %s187, %s203
      %p205 = scmp.eq.s32.totalorder %s27, 0
      %p206 = por %p204, %p205
      %p207 = scmp.le.s32.totalorder 1, %s21
      %p208 = scmp.lt.s32.totalorder %s21, 3
      %p209 = pnand %p207, %p208
      %p210 = pneg %p209
      // Predicated region
      $region9: #{_lambda_.1} parent=5 // pred_check
        _
      $region10: #{_lambda_.1} parent=5 // pred_check_branch
        %212 = sbr.rel (%p209) target = $region12
      $region11: #{_lambda_.1} parent=5 // pred_region
        %s213 = ssub.s32 %s21, 1
        // Predicated region
        $region13: #{_lambda_.1} parent=11 // pred_check
          %p214 = pneg %p68
        $region14: #{_lambda_.1} parent=11 // pred_check_branch
          %216 = sbr.rel (%p214) target = $region16
        $region15: #{_lambda_.1} parent=11 // pred_region
          %s218 = ssub.s32 1024, 1024
          %219 = vsyncadd [#allocation4], %s218
          %s220 = sshll.u32 [#allocation3], 4
          %s221 = int_to_ptr.vmem [resolvable:$true] %s220
          %226 = dma.hbm_to_vmem [thread:$0]  %s1, 1024, %s221, [#allocation4], 128, 128, 8
        $region16: #{_lambda_.1} parent=11 // pred_fallthru
          _
        // Predicated region
        $region17: #{_lambda_.1} parent=11 // pred_check
          %p227 = pneg %p89
        $region18: #{_lambda_.1} parent=11 // pred_check_branch
          %229 = sbr.rel (%p227) target = $region20
        $region19: #{_lambda_.1} parent=11 // pred_region
          %s231 = ssub.s32 1024, 1024
          %232 = vsyncadd [#allocation7], %s231
          %s233 = sshll.u32 [#allocation6], 4
          %s234 = int_to_ptr.vmem [resolvable:$true] %s233
          %239 = dma.hbm_to_vmem [thread:$0]  %s2, 1024, %s234, [#allocation7], 128, 128, 8
        $region20: #{_lambda_.1} parent=11 // pred_fallthru
          _
        // Predicated region
        $region21: #{_lambda_.1} parent=11 // pred_check
          %p240 = pneg %p110
        $region22: #{_lambda_.1} parent=11 // pred_check_branch
          %242 = sbr.rel (%p240) target = $region24
        $region23: #{_lambda_.1} parent=11 // pred_region
          %s244 = ssub.s32 2048, 2048
          %245 = vsyncadd [#allocation7], %s244
          %s246 = sshll.u32 [#allocation8], 4
          %s247 = int_to_ptr.vmem [resolvable:$true] %s246
          %252 = dma.hbm_to_vmem [thread:$0]  %s3, 2048, %s247, [#allocation7], 128, 128, 8
        $region24: #{_lambda_.1} parent=11 // pred_fallthru
          _
        // Predicated region
        $region25: #{_lambda_.1} parent=11 // pred_check
          %p253 = pneg %p131
        $region26: #{_lambda_.1} parent=11 // pred_check_branch
          %255 = sbr.rel (%p253) target = $region28
        $region27: #{_lambda_.1} parent=11 // pred_region
          %s257 = ssub.s32 2048, 2048
          %258 = vsyncadd [#allocation10], %s257
          %s259 = sshll.u32 [#allocation9], 4
          %s260 = int_to_ptr.vmem [resolvable:$true] %s259
          %265 = dma.hbm_to_vmem [thread:$0]  %s4, 2048, %s260, [#allocation10], 128, 128, 8
        $region28: #{_lambda_.1} parent=11 // pred_fallthru
          _
        // Predicated region
        $region29: #{_lambda_.1} parent=11 // pred_check
          %p266 = pneg %p152
        $region30: #{_lambda_.1} parent=11 // pred_check_branch
          %268 = sbr.rel (%p266) target = $region32
        $region31: #{_lambda_.1} parent=11 // pred_region
          _
        $region32: #{_lambda_.1} parent=11 // pred_fallthru
          _
        // Predicated region
        $region33: #{_lambda_.1} parent=11 // pred_check
          %p269 = pneg %p173
        $region34: #{_lambda_.1} parent=11 // pred_check_branch
          %271 = sbr.rel (%p269) target = $region36
        $region35: #{_lambda_.1} parent=11 // pred_region
          _
        $region36: #{_lambda_.1} parent=11 // pred_fallthru
          _
      $region12: #{_lambda_.1} parent=5 // pred_fallthru
        _
      %p272 = scmp.lt.s32.totalorder %s21, 2
      // Predicated region
      $region37: #{_lambda_.1} parent=5 // pred_check
        %p273 = pneg %p272
      $region38: #{_lambda_.1} parent=5 // pred_check_branch
        %275 = sbr.rel (%p273) target = $region40
      $region39: #{_lambda_.1} parent=5 // pred_region
        // Predicated region
        $region41: #{_lambda_.1} parent=39 // pred_check
          %p276 = pneg %p41
        $region42: #{_lambda_.1} parent=39 // pred_check_branch
          %278 = sbr.rel (%p276) target = $region44
        $region43: #{_lambda_.1} parent=39 // pred_region
          %s279 = smul.u32 2, %s21
          %p280 = scmp.lt.s32.totalorder %s279, 3
          %s281 = scalar_select %p280, %s279, 3
          %s282 = smul.addr %s281, 8
          %s283 = scalar_lea.vmem %s0, %s282
          %s284 = smul.u32 2, %s21
        $region44: #{_lambda_.1} parent=39 // pred_fallthru
          _
      $region40: #{_lambda_.1} parent=5 // pred_fallthru
        _
      %p285 = scmp.le.s32.totalorder 1, %s21
      %p286 = scmp.lt.s32.totalorder %s21, 3
      %p287 = pnand %p285, %p286
      %p288 = pneg %p287
      // Predicated region
      $region45: #{_lambda_.1} parent=5 // pred_check
        _
      $region46: #{_lambda_.1} parent=5 // pred_check_branch
        %290 = sbr.rel (%p287) target = $region48
      $region47: #{_lambda_.1} parent=5 // pred_region
        %s291 = ssub.s32 %s21, 1
        // Predicated region
        $region49: #{_lambda_.1} parent=47 // pred_check
          %p292 = pneg %p68
        $region50: #{_lambda_.1} parent=47 // pred_check_branch
          %294 = sbr.rel (%p292) target = $region52
        $region51: #{_lambda_.1} parent=47 // pred_region
          %295 = dma.done [#allocation4], 1024
        $region52: #{_lambda_.1} parent=47 // pred_fallthru
          _
        // Predicated region
        $region53: #{_lambda_.1} parent=47 // pred_check
          %p296 = pneg %p89
        $region54: #{_lambda_.1} parent=47 // pred_check_branch
          %298 = sbr.rel (%p296) target = $region56
        $region55: #{_lambda_.1} parent=47 // pred_region
          %299 = dma.done [#allocation7], 1024
        $region56: #{_lambda_.1} parent=47 // pred_fallthru
          _
        // Predicated region
        $region57: #{_lambda_.1} parent=47 // pred_check
          %p300 = pneg %p110
        $region58: #{_lambda_.1} parent=47 // pred_check_branch
          %302 = sbr.rel (%p300) target = $region60
        $region59: #{_lambda_.1} parent=47 // pred_region
          %303 = dma.done [#allocation7], 2048
        $region60: #{_lambda_.1} parent=47 // pred_fallthru
          _
        // Predicated region
        $region61: #{_lambda_.1} parent=47 // pred_check
          %p304 = pneg %p131
        $region62: #{_lambda_.1} parent=47 // pred_check_branch
          %306 = sbr.rel (%p304) target = $region64
        $region63: #{_lambda_.1} parent=47 // pred_region
          %307 = dma.done [#allocation10], 2048
        $region64: #{_lambda_.1} parent=47 // pred_fallthru
          _
        %s308 = smul.u32 2, %s26
        %p309 = scmp.lt.s32.totalorder %s308, 3
        %s310 = scalar_select %p309, %s308, 3
        %s311 = smul.addr %s310, 8
        %s312 = scalar_lea.vmem %s0, %s311
        %p313 = pneg %p47
        %p314 = pneg %p44
        %p315 = pneg %p68
        %p316 = pneg %p65
        %p317 = pneg %p89
        %p318 = pneg %p86
        %p319 = pneg %p110
        %p320 = pneg %p107
        %p321 = pneg %p131
        %p322 = pneg %p128
        %p323 = pneg %p152
        %p324 = pneg %p149
        %p325 = pneg %p173
        %p326 = pneg %p170
        %p327 = pneg %p199
        %p328 = pneg %p196
        %s329 = sand.u32 %s186, 1
        %s330 = scalar_lea.sflag [#allocation5], %s329
        %s331 = sand.u32 %s186, 1
        %s332 = smul.addr %s331, 2
        %s333 = scalar_lea.vmem [#allocation11], %s332
        %s334 = smul.u32 2, %s26
        %p335 = scmp.lt.s32.totalorder %s334, 3
        %s336 = scalar_select %p335, %s334, 3
        %s337 = smul.addr %s336, 8
        %s338 = scalar_lea.vmem %s0, %s337
        %s339 = smul.u32 2, %s26
        %s340 = smul.u32 2, %s26
        %v341 = vld [vmem:[%s338] sm:$0xff]
        %v342 = vld [vmem:[%s338 + $0x8] sm:$0xff]
        %v343 = vld [vmem:[#allocation3] sm:$0xff]
        %v344 = vld [vmem:[#allocation3 + $0x8] sm:$0xff]
        %v345 = vld [vmem:[#allocation3 + $0x10] sm:$0xff]
        %v346 = vld [vmem:[#allocation3 + $0x18] sm:$0xff]
        %v347 = vld [vmem:[#allocation3 + $0x20] sm:$0xff]
        %v348 = vld [vmem:[#allocation3 + $0x28] sm:$0xff]
        %v349 = vld [vmem:[#allocation3 + $0x30] sm:$0xff]
        %v350 = vld [vmem:[#allocation3 + $0x38] sm:$0xff]
        %v351 = vld [vmem:[#allocation6] sm:$0xff]
        %v352 = vld [vmem:[#allocation6 + $0x8] sm:$0xff]
        %v353 = vld [vmem:[#allocation6 + $0x10] sm:$0xff]
        %v354 = vld [vmem:[#allocation6 + $0x18] sm:$0xff]
        %v355 = vld [vmem:[#allocation6 + $0x20] sm:$0xff]
        %v356 = vld [vmem:[#allocation6 + $0x28] sm:$0xff]
        %v357 = vld [vmem:[#allocation6 + $0x30] sm:$0xff]
        %v358 = vld [vmem:[#allocation6 + $0x38] sm:$0xff]
        %360 = vset.pattern.permute.xlu0 0
        %361 = vperm.xlu0 %360, %v351
        %v362 = vpop.permute.xlu0 %361
        %365 = vset.pattern.permute.xlu0 0
        %366 = vperm.xlu0 %365, %v352
        %v367 = vpop.permute.xlu0 %366
        %370 = vset.pattern.permute.xlu0 0
        %371 = vperm.xlu0 %370, %v353
        %v372 = vpop.permute.xlu0 %371
        %375 = vset.pattern.permute.xlu0 0
        %376 = vperm.xlu0 %375, %v354
        %v377 = vpop.permute.xlu0 %376
        %380 = vset.pattern.permute.xlu0 0
        %381 = vperm.xlu0 %380, %v355
        %v382 = vpop.permute.xlu0 %381
        %385 = vset.pattern.permute.xlu0 0
        %386 = vperm.xlu0 %385, %v356
        %v387 = vpop.permute.xlu0 %386
        %390 = vset.pattern.permute.xlu0 0
        %391 = vperm.xlu0 %390, %v357
        %v392 = vpop.permute.xlu0 %391
        %395 = vset.pattern.permute.xlu0 0
        %396 = vperm.xlu0 %395, %v358
        %v397 = vpop.permute.xlu0 %396
        %vm399 = vcmask 64512
        %v401 = vsel %vm399, %v343, 0
        %v404 = vsel %vm399, %v344, 0
        %v407 = vsel %vm399, %v345, 0
        %v410 = vsel %vm399, %v346, 0
        %v413 = vsel %vm399, %v347, 0
        %v416 = vsel %vm399, %v348, 0
        %v419 = vsel %vm399, %v349, 0
        %v422 = vsel %vm399, %v350, 0
        %424 = vmatprep.subr.mxu0 0.0
        %425 = vmatpush1.msra.mxu0 0.0
        %426 = vmatprep.subr.mxu0 0.0
        %427 = vmatpush1.msra.mxu0 0.0
        %428 = vmatprep.subr.mxu0 0.0
        %429 = vmatpush1.msra.mxu0 0.0
        %430 = vmatprep.subr.mxu0 0.0
        %431 = vmatpush1.msra.mxu0 0.0
        %432 = vmatprep.subr.mxu0 0.0
        %433 = vmatpush1.msra.mxu0 0.0
        %434 = vmatprep.subr.mxu0 0.0
        %435 = vmatpush1.msra.mxu0 0.0
        %436 = vmatprep.subr.mxu0 0.0
        %437 = vmatpush1.msra.mxu0 0.0
        %438 = vmatprep.subr.mxu0 0.0
        %439 = vmatpush1.msra.mxu0 0.0
        %440 = vmatprep.subr.mxu0 0.0
        %441 = vmatpush1.msra.mxu0 0.0
        %442 = vmatprep.subr.mxu0 0.0
        %443 = vmatpush1.msra.mxu0 0.0
        %444 = vmatprep.subr.mxu0 0.0
        %445 = vmatpush1.msra.mxu0 0.0
        %446 = vmatprep.subr.mxu0 0.0
        %447 = vmatpush1.msra.mxu0 0.0
        %448 = vmatprep.subr.mxu0 0.0
        %449 = vmatpush1.msra.mxu0 0.0
        %450 = vmatprep.subr.mxu0 0.0
        %451 = vmatpush1.msra.mxu0 0.0
        %452 = vmatprep.subr.mxu0 0.0
        %453 = vmatpush1.msra.mxu0 0.0
        %454 = vmatprep.subr.mxu0 %v342
        %455 = vmatpush1.msra.mxu0 %v341
        %456 = vmatprep.subr.mxu0 0.0
        %457 = vmatpush2.msra.mxu0 0.0
        %458 = vmatprep.subr.mxu0 0.0
        %459 = vmatpush2.msra.mxu0 0.0
        %460 = vmatprep.subr.mxu0 0.0
        %461 = vmatpush2.msra.mxu0 0.0
        %462 = vmatprep.subr.mxu0 0.0
        %463 = vmatpush2.msra.mxu0 0.0
        %464 = vmatprep.subr.mxu0 0.0
        %465 = vmatpush2.msra.mxu0 0.0
        %466 = vmatprep.subr.mxu0 0.0
        %467 = vmatpush2.msra.mxu0 0.0
        %468 = vmatprep.subr.mxu0 0.0
        %469 = vmatpush2.msra.mxu0 0.0
        %470 = vmatprep.subr.mxu0 0.0
        %471 = vmatpush2.msra.mxu0 0.0
        %472 = vmatprep.subr.mxu0 0.0
        %473 = vmatpush2.msra.mxu0 0.0
        %474 = vmatprep.subr.mxu0 0.0
        %475 = vmatpush2.msra.mxu0 0.0
        %476 = vmatprep.subr.mxu0 0.0
        %477 = vmatpush2.msra.mxu0 0.0
        %478 = vmatprep.subr.mxu0 0.0
        %479 = vmatpush2.msra.mxu0 0.0
        %480 = vmatprep.subr.mxu0 0.0
        %481 = vmatpush2.msra.mxu0 0.0
        %482 = vmatprep.subr.mxu0 0.0
        %483 = vmatpush2.msra.mxu0 0.0
        %484 = vmatprep.subr.mxu0 0.0
        %485 = vmatpush2.msra.mxu0 0.0
        %486 = vmatprep.subr.mxu0 0.0
        %487 = vmatpush2.msra.mxu0 0.0
        %488 = vmatprep.mubr.f32.mxu0 0.0
        %489 = vmatmul.mubr.f32.gmra.mxu0 %v401
        %v490 = vpop.f32.mrf.mxu0
        %v491 = vadd.f32 %v362, %v490
        %v492 = vpop.f32.mrf.mxu0
        %v493 = vadd.f32 %v362, %v492
        %494 = vmatprep.mubr.f32.mxu0 0.0
        %495 = vmatmul.mubr.f32.gmra.mxu0 %v404
        %v496 = vpop.f32.mrf.mxu0
        %v497 = vadd.f32 %v367, %v496
        %v498 = vpop.f32.mrf.mxu0
        %v499 = vadd.f32 %v367, %v498
        %500 = vmatprep.mubr.f32.mxu0 0.0
        %501 = vmatmul.mubr.f32.gmra.mxu0 %v407
        %v502 = vpop.f32.mrf.mxu0
        %v503 = vadd.f32 %v372, %v502
        %v504 = vpop.f32.mrf.mxu0
        %v505 = vadd.f32 %v372, %v504
        %506 = vmatprep.mubr.f32.mxu0 0.0
        %507 = vmatmul.mubr.f32.gmra.mxu0 %v410
        %v508 = vpop.f32.mrf.mxu0
        %v509 = vadd.f32 %v377, %v508
        %v510 = vpop.f32.mrf.mxu0
        %v511 = vadd.f32 %v377, %v510
        %512 = vmatprep.mubr.f32.mxu0 0.0
        %513 = vmatmul.mubr.f32.gmra.mxu0 %v413
        %v514 = vpop.f32.mrf.mxu0
        %v515 = vadd.f32 %v382, %v514
        %v516 = vpop.f32.mrf.mxu0
        %v517 = vadd.f32 %v382, %v516
        %518 = vmatprep.mubr.f32.mxu0 0.0
        %519 = vmatmul.mubr.f32.gmra.mxu0 %v416
        %v520 = vpop.f32.mrf.mxu0
        %v521 = vadd.f32 %v387, %v520
        %v522 = vpop.f32.mrf.mxu0
        %v523 = vadd.f32 %v387, %v522
        %524 = vmatprep.mubr.f32.mxu0 0.0
        %525 = vmatmul.mubr.f32.gmra.mxu0 %v419
        %v526 = vpop.f32.mrf.mxu0
        %v527 = vadd.f32 %v392, %v526
        %v528 = vpop.f32.mrf.mxu0
        %v529 = vadd.f32 %v392, %v528
        %530 = vmatprep.mubr.f32.mxu0 0.0
        %531 = vmatmul.mubr.f32.gmra.mxu0 %v422
        %v532 = vpop.f32.mrf.mxu0
        %v533 = vadd.f32 %v397, %v532
        %v534 = vpop.f32.mrf.mxu0
        %v535 = vadd.f32 %v397, %v534
        %536 = vdwg.mxu0
        %v537 = vtanh.pop %v491
        %v538 = vtanh.pop %v493
        %v539 = vtanh.pop %v497
        %v540 = vtanh.pop %v499
        %v541 = vtanh.pop %v503
        %v542 = vtanh.pop %v505
        %v543 = vtanh.pop %v509
        %v544 = vtanh.pop %v511
        %v545 = vtanh.pop %v515
        %v546 = vtanh.pop %v517
        %v547 = vtanh.pop %v521
        %v548 = vtanh.pop %v523
        %v549 = vtanh.pop %v527
        %v550 = vtanh.pop %v529
        %v551 = vtanh.pop %v533
        %v552 = vtanh.pop %v535
        %v553 = vld [vmem:[#allocation8] sm:$0xff]
        %v554 = vld [vmem:[#allocation8 + $0x8] sm:$0xff]
        %v555 = vld [vmem:[#allocation8 + $0x10] sm:$0xff]
        %v556 = vld [vmem:[#allocation8 + $0x18] sm:$0xff]
        %v557 = vld [vmem:[#allocation8 + $0x20] sm:$0xff]
        %v558 = vld [vmem:[#allocation8 + $0x28] sm:$0xff]
        %v559 = vld [vmem:[#allocation8 + $0x30] sm:$0xff]
        %v560 = vld [vmem:[#allocation8 + $0x38] sm:$0xff]
        %v561 = vld [vmem:[#allocation8 + $0x40] sm:$0xff]
        %v562 = vld [vmem:[#allocation8 + $0x48] sm:$0xff]
        %v563 = vld [vmem:[#allocation8 + $0x50] sm:$0xff]
        %v564 = vld [vmem:[#allocation8 + $0x58] sm:$0xff]
        %v565 = vld [vmem:[#allocation8 + $0x60] sm:$0xff]
        %v566 = vld [vmem:[#allocation8 + $0x68] sm:$0xff]
        %v567 = vld [vmem:[#allocation8 + $0x70] sm:$0xff]
        %v568 = vld [vmem:[#allocation8 + $0x78] sm:$0xff]
        %v569 = vld [vmem:[#allocation9] sm:$0xff]
        %v570 = vld [vmem:[#allocation9 + $0x8] sm:$0xff]
        %v571 = vld [vmem:[#allocation9 + $0x10] sm:$0xff]
        %v572 = vld [vmem:[#allocation9 + $0x18] sm:$0xff]
        %v573 = vld [vmem:[#allocation9 + $0x20] sm:$0xff]
        %v574 = vld [vmem:[#allocation9 + $0x28] sm:$0xff]
        %v575 = vld [vmem:[#allocation9 + $0x30] sm:$0xff]
        %v576 = vld [vmem:[#allocation9 + $0x38] sm:$0xff]
        %v577 = vld [vmem:[#allocation9 + $0x40] sm:$0xff]
        %v578 = vld [vmem:[#allocation9 + $0x48] sm:$0xff]
        %v579 = vld [vmem:[#allocation9 + $0x50] sm:$0xff]
        %v580 = vld [vmem:[#allocation9 + $0x58] sm:$0xff]
        %v581 = vld [vmem:[#allocation9 + $0x60] sm:$0xff]
        %v582 = vld [vmem:[#allocation9 + $0x68] sm:$0xff]
        %v583 = vld [vmem:[#allocation9 + $0x70] sm:$0xff]
        %v584 = vld [vmem:[#allocation9 + $0x78] sm:$0xff]
        %586 = vset.pattern.permute.xlu0 0
        %587 = vperm.xlu0 %586, %v569
        %v588 = vpop.permute.xlu0 %587
        %591 = vset.pattern.permute.xlu0 0
        %592 = vperm.xlu0 %591, %v570
        %v593 = vpop.permute.xlu0 %592
        %596 = vset.pattern.permute.xlu0 0
        %597 = vperm.xlu0 %596, %v571
        %v598 = vpop.permute.xlu0 %597
        %601 = vset.pattern.permute.xlu0 0
        %602 = vperm.xlu0 %601, %v572
        %v603 = vpop.permute.xlu0 %602
        %606 = vset.pattern.permute.xlu0 0
        %607 = vperm.xlu0 %606, %v573
        %v608 = vpop.permute.xlu0 %607
        %611 = vset.pattern.permute.xlu0 0
        %612 = vperm.xlu0 %611, %v574
        %v613 = vpop.permute.xlu0 %612
        %616 = vset.pattern.permute.xlu0 0
        %617 = vperm.xlu0 %616, %v575
        %v618 = vpop.permute.xlu0 %617
        %621 = vset.pattern.permute.xlu0 0
        %622 = vperm.xlu0 %621, %v576
        %v623 = vpop.permute.xlu0 %622
        %626 = vset.pattern.permute.xlu0 0
        %627 = vperm.xlu0 %626, %v577
        %v628 = vpop.permute.xlu0 %627
        %631 = vset.pattern.permute.xlu0 0
        %632 = vperm.xlu0 %631, %v578
        %v633 = vpop.permute.xlu0 %632
        %636 = vset.pattern.permute.xlu0 0
        %637 = vperm.xlu0 %636, %v579
        %v638 = vpop.permute.xlu0 %637
        %641 = vset.pattern.permute.xlu0 0
        %642 = vperm.xlu0 %641, %v580
        %v643 = vpop.permute.xlu0 %642
        %646 = vset.pattern.permute.xlu0 0
        %647 = vperm.xlu0 %646, %v581
        %v648 = vpop.permute.xlu0 %647
        %651 = vset.pattern.permute.xlu0 0
        %652 = vperm.xlu0 %651, %v582
        %v653 = vpop.permute.xlu0 %652
        %656 = vset.pattern.permute.xlu0 0
        %657 = vperm.xlu0 %656, %v583
        %v658 = vpop.permute.xlu0 %657
        %661 = vset.pattern.permute.xlu0 0
        %662 = vperm.xlu0 %661, %v584
        %v663 = vpop.permute.xlu0 %662
        %vm665 = vcmask 523264
        %v667 = vsel %vm665, %v553, 0
        %v670 = vsel %vm665, %v554, 0
        %v673 = vsel %vm665, %v555, 0
        %v676 = vsel %vm665, %v556, 0
        %v679 = vsel %vm665, %v557, 0
        %v682 = vsel %vm665, %v558, 0
        %v685 = vsel %vm665, %v559, 0
        %v688 = vsel %vm665, %v560, 0
        %v691 = vsel %vm665, %v561, 0
        %v694 = vsel %vm665, %v562, 0
        %v697 = vsel %vm665, %v563, 0
        %v700 = vsel %vm665, %v564, 0
        %v703 = vsel %vm665, %v565, 0
        %v706 = vsel %vm665, %v566, 0
        %v709 = vsel %vm665, %v567, 0
        %v712 = vsel %vm665, %v568, 0
        %714 = vmatprep.subr.mxu0 0.0
        %715 = vmatpush1.msra.mxu0 0.0
        %716 = vmatprep.subr.mxu0 0.0
        %717 = vmatpush1.msra.mxu0 0.0
        %718 = vmatprep.subr.mxu0 0.0
        %719 = vmatpush1.msra.mxu0 0.0
        %720 = vmatprep.subr.mxu0 0.0
        %721 = vmatpush1.msra.mxu0 0.0
        %722 = vmatprep.subr.mxu0 0.0
        %723 = vmatpush1.msra.mxu0 0.0
        %724 = vmatprep.subr.mxu0 0.0
        %725 = vmatpush1.msra.mxu0 0.0
        %726 = vmatprep.subr.mxu0 0.0
        %727 = vmatpush1.msra.mxu0 0.0
        %728 = vmatprep.subr.mxu0 0.0
        %729 = vmatpush1.msra.mxu0 0.0
        %730 = vmatprep.subr.mxu0 %v552
        %731 = vmatpush1.msra.mxu0 %v551
        %732 = vmatprep.subr.mxu0 %v550
        %733 = vmatpush1.msra.mxu0 %v549
        %734 = vmatprep.subr.mxu0 %v548
        %735 = vmatpush1.msra.mxu0 %v547
        %736 = vmatprep.subr.mxu0 %v546
        %737 = vmatpush1.msra.mxu0 %v545
        %738 = vmatprep.subr.mxu0 %v544
        %739 = vmatpush1.msra.mxu0 %v543
        %740 = vmatprep.subr.mxu0 %v542
        %741 = vmatpush1.msra.mxu0 %v541
        %742 = vmatprep.subr.mxu0 %v540
        %743 = vmatpush1.msra.mxu0 %v539
        %744 = vmatprep.subr.mxu0 %v538
        %745 = vmatpush1.msra.mxu0 %v537
        %746 = vmatprep.subr.mxu0 0.0
        %747 = vmatpush2.msra.mxu0 0.0
        %748 = vmatprep.subr.mxu0 0.0
        %749 = vmatpush2.msra.mxu0 0.0
        %750 = vmatprep.subr.mxu0 0.0
        %751 = vmatpush2.msra.mxu0 0.0
        %752 = vmatprep.subr.mxu0 0.0
        %753 = vmatpush2.msra.mxu0 0.0
        %754 = vmatprep.subr.mxu0 0.0
        %755 = vmatpush2.msra.mxu0 0.0
        %756 = vmatprep.subr.mxu0 0.0
        %757 = vmatpush2.msra.mxu0 0.0
        %758 = vmatprep.subr.mxu0 0.0
        %759 = vmatpush2.msra.mxu0 0.0
        %760 = vmatprep.subr.mxu0 0.0
        %761 = vmatpush2.msra.mxu0 0.0
        %762 = vmatprep.subr.mxu0 0.0
        %763 = vmatpush2.msra.mxu0 0.0
        %764 = vmatprep.subr.mxu0 0.0
        %765 = vmatpush2.msra.mxu0 0.0
        %766 = vmatprep.subr.mxu0 0.0
        %767 = vmatpush2.msra.mxu0 0.0
        %768 = vmatprep.subr.mxu0 0.0
        %769 = vmatpush2.msra.mxu0 0.0
        %770 = vmatprep.subr.mxu0 0.0
        %771 = vmatpush2.msra.mxu0 0.0
        %772 = vmatprep.subr.mxu0 0.0
        %773 = vmatpush2.msra.mxu0 0.0
        %774 = vmatprep.subr.mxu0 0.0
        %775 = vmatpush2.msra.mxu0 0.0
        %776 = vmatprep.subr.mxu0 0.0
        %777 = vmatpush2.msra.mxu0 0.0
        %778 = vmatprep.mubr.f32.mxu0 0.0
        %779 = vmatmul.mubr.f32.gmra.mxu0 %v667
        %v780 = vpop.f32.mrf.mxu0
        %v781 = vadd.f32 %v588, %v780
        %v782 = vpop.f32.mrf.mxu0
        %v783 = vadd.f32 %v588, %v782
        %784 = vmatprep.mubr.f32.mxu0 0.0
        %785 = vmatmul.mubr.f32.gmra.mxu0 %v670
        %v786 = vpop.f32.mrf.mxu0
        %v787 = vadd.f32 %v593, %v786
        %v788 = vpop.f32.mrf.mxu0
        %v789 = vadd.f32 %v593, %v788
        %790 = vmatprep.mubr.f32.mxu0 0.0
        %791 = vmatmul.mubr.f32.gmra.mxu0 %v673
        %v792 = vpop.f32.mrf.mxu0
        %v793 = vadd.f32 %v598, %v792
        %v794 = vpop.f32.mrf.mxu0
        %v795 = vadd.f32 %v598, %v794
        %796 = vmatprep.mubr.f32.mxu0 0.0
        %797 = vmatmul.mubr.f32.gmra.mxu0 %v676
        %v798 = vpop.f32.mrf.mxu0
        %v799 = vadd.f32 %v603, %v798
        %v800 = vpop.f32.mrf.mxu0
        %v801 = vadd.f32 %v603, %v800
        %802 = vmatprep.mubr.f32.mxu0 0.0
        %803 = vmatmul.mubr.f32.gmra.mxu0 %v679
        %v804 = vpop.f32.mrf.mxu0
        %v805 = vadd.f32 %v608, %v804
        %v806 = vpop.f32.mrf.mxu0
        %v807 = vadd.f32 %v608, %v806
        %808 = vmatprep.mubr.f32.mxu0 0.0
        %809 = vmatmul.mubr.f32.gmra.mxu0 %v682
        %v810 = vpop.f32.mrf.mxu0
        %v811 = vadd.f32 %v613, %v810
        %v812 = vpop.f32.mrf.mxu0
        %v813 = vadd.f32 %v613, %v812
        %814 = vmatprep.mubr.f32.mxu0 0.0
        %815 = vmatmul.mubr.f32.gmra.mxu0 %v685
        %v816 = vpop.f32.mrf.mxu0
        %v817 = vadd.f32 %v618, %v816
        %v818 = vpop.f32.mrf.mxu0
        %v819 = vadd.f32 %v618, %v818
        %820 = vmatprep.mubr.f32.mxu0 0.0
        %821 = vmatmul.mubr.f32.gmra.mxu0 %v688
        %v822 = vpop.f32.mrf.mxu0
        %v823 = vadd.f32 %v623, %v822
        %v824 = vpop.f32.mrf.mxu0
        %v825 = vadd.f32 %v623, %v824
        %826 = vmatprep.mubr.f32.mxu0 0.0
        %827 = vmatmul.mubr.f32.gmra.mxu0 %v691
        %v828 = vpop.f32.mrf.mxu0
        %v829 = vadd.f32 %v628, %v828
        %v830 = vpop.f32.mrf.mxu0
        %v831 = vadd.f32 %v628, %v830
        %832 = vmatprep.mubr.f32.mxu0 0.0
        %833 = vmatmul.mubr.f32.gmra.mxu0 %v694
        %v834 = vpop.f32.mrf.mxu0
        %v835 = vadd.f32 %v633, %v834
        %v836 = vpop.f32.mrf.mxu0
        %v837 = vadd.f32 %v633, %v836
        %838 = vmatprep.mubr.f32.mxu0 0.0
        %839 = vmatmul.mubr.f32.gmra.mxu0 %v697
        %v840 = vpop.f32.mrf.mxu0
        %v841 = vadd.f32 %v638, %v840
        %v842 = vpop.f32.mrf.mxu0
        %v843 = vadd.f32 %v638, %v842
        %844 = vmatprep.mubr.f32.mxu0 0.0
        %845 = vmatmul.mubr.f32.gmra.mxu0 %v700
        %v846 = vpop.f32.mrf.mxu0
        %v847 = vadd.f32 %v643, %v846
        %v848 = vpop.f32.mrf.mxu0
        %v849 = vadd.f32 %v643, %v848
        %850 = vmatprep.mubr.f32.mxu0 0.0
        %851 = vmatmul.mubr.f32.gmra.mxu0 %v703
        %v852 = vpop.f32.mrf.mxu0
        %v853 = vadd.f32 %v648, %v852
        %v854 = vpop.f32.mrf.mxu0
        %v855 = vadd.f32 %v648, %v854
        %856 = vmatprep.mubr.f32.mxu0 0.0
        %857 = vmatmul.mubr.f32.gmra.mxu0 %v706
        %v858 = vpop.f32.mrf.mxu0
        %v859 = vadd.f32 %v653, %v858
        %v860 = vpop.f32.mrf.mxu0
        %v861 = vadd.f32 %v653, %v860
        %862 = vmatprep.mubr.f32.mxu0 0.0
        %863 = vmatmul.mubr.f32.gmra.mxu0 %v709
        %v864 = vpop.f32.mrf.mxu0
        %v865 = vadd.f32 %v658, %v864
        %v866 = vpop.f32.mrf.mxu0
        %v867 = vadd.f32 %v658, %v866
        %868 = vmatprep.mubr.f32.mxu0 0.0
        %869 = vmatmul.mubr.f32.gmra.mxu0 %v712
        %v870 = vpop.f32.mrf.mxu0
        %v871 = vadd.f32 %v663, %v870
        %v872 = vpop.f32.mrf.mxu0
        %v873 = vadd.f32 %v663, %v872
        %874 = vdwg.mxu0
        %v875 = vtanh.pop %v781
        %v876 = vtanh.pop %v783
        %v877 = vtanh.pop %v787
        %v878 = vtanh.pop %v789
        %v879 = vtanh.pop %v793
        %v880 = vtanh.pop %v795
        %v881 = vtanh.pop %v799
        %v882 = vtanh.pop %v801
        %v883 = vtanh.pop %v805
        %v884 = vtanh.pop %v807
        %v885 = vtanh.pop %v811
        %v886 = vtanh.pop %v813
        %v887 = vtanh.pop %v817
        %v888 = vtanh.pop %v819
        %v889 = vtanh.pop %v823
        %v890 = vtanh.pop %v825
        %v891 = vtanh.pop %v829
        %v892 = vtanh.pop %v831
        %v893 = vtanh.pop %v835
        %v894 = vtanh.pop %v837
        %v895 = vtanh.pop %v841
        %v896 = vtanh.pop %v843
        %v897 = vtanh.pop %v847
        %v898 = vtanh.pop %v849
        %v899 = vtanh.pop %v853
        %v900 = vtanh.pop %v855
        %v901 = vtanh.pop %v859
        %v902 = vtanh.pop %v861
        %v903 = vtanh.pop %v865
        %v904 = vtanh.pop %v867
        %v905 = vtanh.pop %v871
        %v906 = vtanh.pop %v873
        %v907 = vld [vmem:[%s5] sm:$0x1]
        %v908 = vld [vmem:[#allocation2] sm:$0x1]
        %910 = vset.pattern.permute.xlu0 0
        %911 = vperm.xlu0 %910, %v908
        %v912 = vpop.permute.xlu0 %911
        %v914 = vlaneseq
        %v915 = vshrl.u32 %v914, 7
        %v916 = vsub.s32 0, %v915
        %v917 = vrot.slane %v912, %v916
        %918 = vmatprep.subr.mxu0 %v906
        %919 = vmatpush1.msra.mxu0 %v905
        %920 = vmatprep.subr.mxu0 %v904
        %921 = vmatpush1.msra.mxu0 %v903
        %922 = vmatprep.subr.mxu0 %v902
        %923 = vmatpush1.msra.mxu0 %v901
        %924 = vmatprep.subr.mxu0 %v900
        %925 = vmatpush1.msra.mxu0 %v899
        %926 = vmatprep.subr.mxu0 %v898
        %927 = vmatpush1.msra.mxu0 %v897
        %928 = vmatprep.subr.mxu0 %v896
        %929 = vmatpush1.msra.mxu0 %v895
        %930 = vmatprep.subr.mxu0 %v894
        %931 = vmatpush1.msra.mxu0 %v893
        %932 = vmatprep.subr.mxu0 %v892
        %933 = vmatpush1.msra.mxu0 %v891
        %934 = vmatprep.subr.mxu0 %v890
        %935 = vmatpush1.msra.mxu0 %v889
        %936 = vmatprep.subr.mxu0 %v888
        %937 = vmatpush1.msra.mxu0 %v887
        %938 = vmatprep.subr.mxu0 %v886
        %939 = vmatpush1.msra.mxu0 %v885
        %940 = vmatprep.subr.mxu0 %v884
        %941 = vmatpush1.msra.mxu0 %v883
        %942 = vmatprep.subr.mxu0 %v882
        %943 = vmatpush1.msra.mxu0 %v881
        %944 = vmatprep.subr.mxu0 %v880
        %945 = vmatpush1.msra.mxu0 %v879
        %946 = vmatprep.subr.mxu0 %v878
        %947 = vmatpush1.msra.mxu0 %v877
        %948 = vmatprep.subr.mxu0 %v876
        %949 = vmatpush1.msra.mxu0 %v875
        %950 = vmatprep.subr.mxu0 0.0
        %951 = vmatpush2.msra.mxu0 0.0
        %952 = vmatprep.subr.mxu0 0.0
        %953 = vmatpush2.msra.mxu0 0.0
        %954 = vmatprep.subr.mxu0 0.0
        %955 = vmatpush2.msra.mxu0 0.0
        %956 = vmatprep.subr.mxu0 0.0
        %957 = vmatpush2.msra.mxu0 0.0
        %958 = vmatprep.subr.mxu0 0.0
        %959 = vmatpush2.msra.mxu0 0.0
        %960 = vmatprep.subr.mxu0 0.0
        %961 = vmatpush2.msra.mxu0 0.0
        %962 = vmatprep.subr.mxu0 0.0
        %963 = vmatpush2.msra.mxu0 0.0
        %964 = vmatprep.subr.mxu0 0.0
        %965 = vmatpush2.msra.mxu0 0.0
        %966 = vmatprep.subr.mxu0 0.0
        %967 = vmatpush2.msra.mxu0 0.0
        %968 = vmatprep.subr.mxu0 0.0
        %969 = vmatpush2.msra.mxu0 0.0
        %970 = vmatprep.subr.mxu0 0.0
        %971 = vmatpush2.msra.mxu0 0.0
        %972 = vmatprep.subr.mxu0 0.0
        %973 = vmatpush2.msra.mxu0 0.0
        %974 = vmatprep.subr.mxu0 0.0
        %975 = vmatpush2.msra.mxu0 0.0
        %976 = vmatprep.subr.mxu0 0.0
        %977 = vmatpush2.msra.mxu0 0.0
        %978 = vmatprep.subr.mxu0 0.0
        %979 = vmatpush2.msra.mxu0 0.0
        %980 = vmatprep.subr.mxu0 0.0
        %981 = vmatpush2.msra.mxu0 0.0
        %982 = vmatprep.mubr.f32.mxu0 0.0
        %983 = vmatmul.mubr.f32.gmra.mxu0 %v907
        %v984 = vpop.f32.mrf.mxu0
        %v985 = vadd.f32 %v917, %v984
        %v986 = vpop.f32.mrf.mxu0
        %v987 = vadd.f32 %v917, %v986
        %988 = vdwg.mxu0
        %v989 = vxor.u32 %v985, 2147483648
        %v990 = vxor.u32 %v987, 2147483648
        %v991 = vmul.f32 %v989, 1.442695
        %v992 = vpow.pop %v991
        %v993 = vmul.f32 %v990, 1.442695
        %v994 = vpow.pop %v993
        %v995 = vadd.f32 %v992, 1.0
        %v996 = vadd.f32 %v994, 1.0
        %v997 = vrcp.pop %v995
        %v998 = vmul.f32 1.0, %v997
        %v999 = vrcp.pop %v996
        %v1000 = vmul.f32 1.0, %v999
        %v1003 = vcombine.low %v998, %v1000
        %v1005 = vunpack.c.l.s4 1966171168
        %v1006 = vunpack.c.0.s8 %v1005
        %v1007 = vlaneseq
        %v1008 = vshrl.u32 %v1007, 7
        %v1009 = vsub.s32 %v1006, %v1008
        %v1010 = vrot.slane %v1003, %v1009
        %v1012 = vunpack.c.l.s4 1966171168
        %v1013 = vunpack.c.0.s8 %v1012
        %v1014 = vlaneseq
        %v1015 = vshrl.u32 %v1014, 7
        %v1016 = vsub.s32 %v1013, %v1015
        %v1017 = vrot.slane %v1010, %v1016
        %v1019 = vlaneseq
        %vm1020 = vcmp.ge.s32.totalorder %v1019, 0
        %vm1021 = vcmp.lt.s32.totalorder %v1019, 256
        %vm1022 = vmand %vm1020, %vm1021
        %1023 = vst.msk [vmem:[%s333] sm:$0x3] %vm1022, %v1017
        %s1024 = sand.u32 %s186, 1
        %s1025 = scalar_lea.sflag [#allocation5], %s1024
        %s1026 = sand.u32 %s186, 1
        %s1027 = smul.addr %s1026, 2
        %s1028 = scalar_lea.vmem [#allocation11], %s1027
        // Predicated region
        $region65: #{_lambda_.1} parent=47 // pred_check
          %p1029 = pneg %p196
        $region66: #{_lambda_.1} parent=47 // pred_check_branch
          %1031 = sbr.rel (%p1029) target = $region68
        $region67: #{_lambda_.1} parent=47 // pred_region
          %s1032 = smul.u32 2, %s26
          %s1034 = ssub.s32 32, 32
          %1035 = vsyncadd %s1025, %s1034
          %s1036 = smul.addr %s1032, 16
          %s1037 = scalar_lea.hbm %s7, %s1036
          %s1039 = sshll.u32 %s1028, 4
          %s1040 = int_to_ptr.vmem [resolvable:$true] %s1039
          %1042 = dma.vmem_to_hbm [thread:$0]  %s1040, 32, %s1037, %s1025
        $region68: #{_lambda_.1} parent=47 // pred_fallthru
          _
      $region48: #{_lambda_.1} parent=5 // pred_fallthru
        _
      %p1043 = scmp.le.s32.totalorder 2, %s21
      // Predicated region
      $region69: #{_lambda_.1} parent=5 // pred_check
        %p1044 = pneg %p1043
      $region70: #{_lambda_.1} parent=5 // pred_check_branch
        %1046 = sbr.rel (%p1044) target = $region72
      $region71: #{_lambda_.1} parent=5 // pred_region
        %s1047 = ssub.s32 %s21, 2
        // Predicated region
        $region73: #{_lambda_.1} parent=71 // pred_check
          %p1048 = pneg %p202
        $region74: #{_lambda_.1} parent=71 // pred_check_branch
          %1050 = sbr.rel (%p1048) target = $region76
        $region75: #{_lambda_.1} parent=71 // pred_region
          %s1051 = sand.u32 %s187, 1
          %s1052 = scalar_lea.sflag [#allocation5], %s1051
          %s1053 = sand.u32 %s187, 1
          %s1054 = smul.addr %s1053, 2
          %s1055 = scalar_lea.vmem [#allocation11], %s1054
          %1056 = dma.done %s1052, 32
        $region76: #{_lambda_.1} parent=71 // pred_fallthru
          _
      $region72: #{_lambda_.1} parent=5 // pred_fallthru
        _
    $region6: #{_lambda_.1} parent=1 // loop_footer
      %s25 = sadd.s32 1, %s21
    $region7: #{_lambda_.1} parent=1 // loop_footer_branch
      %20 = sbr.rel target = $region3
    $region8: #{_lambda_.1} parent=1 // loop_exit
      _
    %1057 = vsyncpa [#allocation4], 1
    %s1058 = scalar_lea.sflag [#allocation4], 1
    %1059 = vsyncpa %s1058, 1
    %1060 = vsyncpa [#allocation7], 1
    %1061 = vsyncpa [#allocation10], 1
    %1062 = vsyncpa [#allocation5], 1
    %s1063 = scalar_lea.sflag [#allocation5], 1
    %1064 = vsyncpa %s1063, 1

</llo_original>
